<compile_context>
chip_gen: v7x
topology: tpu7x:2x2x1
jax: 0.10.0
libtpu: 0.0.40
codegen_flags: <defaults>
</compile_context>

<pallas_src>
import math
from functools import lru_cache

import jax
import jax.numpy as jnp
from jax import lax
from jax.experimental import pallas as pl
from jax.experimental.pallas import tpu as pltpu


# ----------------------------------------------------------------------------
# Generation-aware VMEM budgets
# ----------------------------------------------------------------------------
@lru_cache(maxsize=1)
def _vmem_capacity_bytes():
    try:
        info = pltpu.get_tpu_info()
        cap = getattr(info, "vmem_capacity_bytes", None)
        if cap:
            return int(cap)
    except Exception:
        pass
    return 64 * 1024 * 1024          # conservative fallback (v7x per-TC VMEM)


def _vmem_limit_bytes():
    # ~60% of physical VMEM: ~38 MiB on v7x, ~76 MiB on v5e/v6e.
    return int(0.6 * _vmem_capacity_bytes())


# ----------------------------------------------------------------------------
# Tiled matmul + bias kernel (fused QKV projection and out_proj)
# ----------------------------------------------------------------------------
def _matmul_bias_kernel(x_ref, w_ref, b_ref, o_ref, acc_ref):
    @pl.when(pl.program_id(2) == 0)
    def _():
        acc_ref[...] = jnp.zeros_like(acc_ref)

    acc_ref[...] += jnp.dot(
        x_ref[...], w_ref[...], preferred_element_type=jnp.float32
    )

    @pl.when(pl.program_id(2) == pl.num_programs(2) - 1)
    def _():
        o_ref[...] = (acc_ref[...] + b_ref[...]).astype(o_ref.dtype)


def _choose_tile(dim, candidates=(512, 256, 128)):
    """Return (tile, padded_dim). Never an unbounded full-dim tile for big dims."""
    if dim <= candidates[0]:
        return dim, dim                      # small dim: single full-extent tile
    for c in candidates:
        if dim % c == 0:
            return c, dim
    padded = pl.cdiv(dim, 128) * 128         # pad instead of one huge tile
    for c in candidates:
        if padded % c == 0:
            return c, padded
    return 128, padded


def pallas_matmul_bias(x, w_t, b, *, out_dtype=None):
    """out = x @ w_t + b.  x: (M, K), w_t: (K, N) pre-transposed, b: (N,) or (1, N).

    Output is emitted in `out_dtype` (defaults to x.dtype) so downstream kernels
    read the narrow dtype directly; accumulation is always f32.
    """
    M, K = x.shape
    K2, N = w_t.shape
    assert K == K2, (K, K2)
    if out_dtype is None:
        out_dtype = x.dtype
    w_t = w_t.astype(x.dtype)
    b2 = jnp.asarray(b, jnp.float32).reshape(1, N)

    tm, Mp = _choose_tile(M)
    tn, Np = _choose_tile(N)
    tk, Kp = _choose_tile(K)
    if Mp != M or Kp != K:
        x = jnp.pad(x, ((0, Mp - M), (0, Kp - K)))
    if Kp != K or Np != N:
        w_t = jnp.pad(w_t, ((0, Kp - K), (0, Np - N)))
    if Np != N:
        b2 = jnp.pad(b2, ((0, 0), (0, Np - N)))

    grid = (Mp // tm, Np // tn, Kp // tk)

    out = pl.pallas_call(
        _matmul_bias_kernel,
        out_shape=jax.ShapeDtypeStruct((Mp, Np), out_dtype),
        grid_spec=pltpu.PrefetchScalarGridSpec(
            num_scalar_prefetch=0,
            grid=grid,
            in_specs=[
                pl.BlockSpec((tm, tk), lambda i, j, k: (i, k)),
                # If profiling shows exposed DMA on this K-streamed operand,
                # sweep pipeline_mode=pl.Buffered(3) here.
                pl.BlockSpec((tk, tn), lambda i, j, k: (k, j)),
                pl.BlockSpec((1, tn), lambda i, j, k: (0, j)),
            ],
            out_specs=pl.BlockSpec((tm, tn), lambda i, j, k: (i, j)),
            scratch_shapes=[pltpu.VMEM((tm, tn), jnp.float32)],
        ),
        compiler_params=pltpu.CompilerParams(
            dimension_semantics=("parallel", "parallel", "arbitrary"),
            vmem_limit_bytes=_vmem_limit_bytes(),
        ),
    )(x, w_t, b2)

    if Mp != M or Np != N:
        out = out[:M, :N]
    return out


# ----------------------------------------------------------------------------
# Flash-style scaled-dot-product attention
#   grid = (batch, q-tiles, kv-tiles); inputs read directly from the
#   (L, N, 3, H, hd) view of the fused QKV output; output written as
#   (L, N, H, hd) so merging heads afterwards is a free reshape.
# ----------------------------------------------------------------------------
def _flash_sdpa_kernel(q_ref, k_ref, v_ref, o_ref, acc_ref, m_ref, l_ref):
    # q_ref: (Lq, H, hd); k_ref / v_ref: (Lk, H, hd); o_ref: (Lq, H, hd)
    # acc_ref: (H, Lq, hd) f32; m_ref / l_ref: (H, Lq, 1) f32
    H = q_ref.shape[1]
    ki = pl.program_id(2)

    @pl.when(ki == 0)
    def _():
        m_ref[...] = jnp.full_like(m_ref, -jnp.inf)
        l_ref[...] = jnp.zeros_like(l_ref)
        acc_ref[...] = jnp.zeros_like(acc_ref)

    for h in range(H):                       # static unroll over heads
        qh = q_ref[:, h, :]                  # (Lq, hd); 1/sqrt(hd) folded into Wq
        kh = k_ref[:, h, :]                  # (Lk, hd)
        vh = v_ref[:, h, :]                  # (Lk, hd)
        # (Lq, hd) x (Lk, hd) -> (Lq, Lk), contraction over hd, f32 accumulation.
        s = lax.dot_general(
            qh, kh, (((1,), (1,)), ((), ())),
            preferred_element_type=jnp.float32)
        m_prev = m_ref[h]                                        # (Lq, 1)
        m_new = jnp.maximum(m_prev, jnp.max(s, axis=-1, keepdims=True))
        alpha = jnp.exp(m_prev - m_new)      # keep softmax math in f32 (v5e)
        p = jnp.exp(s - m_new)
        l_ref[h] = alpha * l_ref[h] + jnp.sum(p, axis=-1, keepdims=True)
        acc_ref[h] = alpha * acc_ref[h] + jnp.dot(
            p.astype(vh.dtype), vh, preferred_element_type=jnp.float32)
        m_ref[h] = m_new

    @pl.when(ki == pl.num_programs(2) - 1)
    def _():
        for h in range(H):
            inv = pl.reciprocal(l_ref[h], approx=True)           # EUP slot
            o_ref[:, h, :] = (acc_ref[h] * inv).astype(o_ref.dtype)


def _sdpa_footprint_bytes(Lq, Lk, H, hd, itemsize):
    io = 2 * itemsize * (2 * Lq * H * hd + 2 * Lk * H * hd)  # q,o,k,v double-buffered
    scratch = 4 * H * Lq * (hd + 2)                          # acc, m, l (f32)
    temps = 4 * Lq * Lk * 3                                  # s, p (f32) + bf16 copy
    return io + scratch + temps


def _pick_seq_tile(L, H, hd, itemsize, budget):
    cands = []
    if L <= 256:
        cands.append(L)
    cands += [c for c in (256, 128, 64, 32, 16, 8) if c < L and L % c == 0]
    if not cands:
        cands = [L]   # TODO(synk): pad + mask ragged sequence lengths instead
    for t in cands:
        if _sdpa_footprint_bytes(t, t, H, hd, itemsize) <= budget:
            return t
    return cands[-1]


def pallas_sdpa(qkv):
    """qkv: (L, N, 3, H, hd) -> (L, N, H, hd), same dtype."""
    L, N, three, H, hd = qkv.shape
    assert three == 3
    budget = max(8 << 20, min(_vmem_limit_bytes() // 3, 24 << 20))
    Lt = _pick_seq_tile(L, H, hd, qkv.dtype.itemsize, budget)
    nq = L // Lt
    nkv = L // Lt

    q_spec = pl.BlockSpec((Lt, None, None, H, hd), lambda n, qi, ki: (qi, n, 0, 0, 0))
    k_spec = pl.BlockSpec((Lt, None, None, H, hd), lambda n, qi, ki: (ki, n, 1, 0, 0))
    v_spec = pl.BlockSpec((Lt, None, None, H, hd), lambda n, qi, ki: (ki, n, 2, 0, 0))
    o_spec = pl.BlockSpec((Lt, None, H, hd), lambda n, qi, ki: (qi, n, 0, 0))

    return pl.pallas_call(
        _flash_sdpa_kernel,
        out_shape=jax.ShapeDtypeStruct((L, N, H, hd), qkv.dtype),
        grid_spec=pltpu.PrefetchScalarGridSpec(
            num_scalar_prefetch=0,
            grid=(N, nq, nkv),                 # reduction (kv) axis last
            in_specs=[q_spec, k_spec, v_spec],
            out_specs=o_spec,
            scratch_shapes=[
                pltpu.VMEM((H, Lt, hd), jnp.float32),   # running output acc
                pltpu.VMEM((H, Lt, 1), jnp.float32),    # running max
                pltpu.VMEM((H, Lt, 1), jnp.float32),    # running sum
            ],
        ),
        compiler_params=pltpu.CompilerParams(
            dimension_semantics=("parallel", "parallel", "arbitrary"),
            vmem_limit_bytes=_vmem_limit_bytes(),
        ),
    )(qkv, qkv, qkv)


# ----------------------------------------------------------------------------
# Parameter setup (PyTorch-convention params) + one-time fusion / pre-transpose
# ----------------------------------------------------------------------------
def init_attention_params(key, dim):
    ks = jax.random.split(key, 10)
    s = 1.0 / math.sqrt(dim)
    return {
        # The three outer nn.Linear layers (weight: (out, in))
        "q_w": jax.random.uniform(ks[0], (dim, dim), jnp.float32, -s, s),
        "q_b": jax.random.uniform(ks[1], (dim,), jnp.float32, -s, s),
        "k_w": jax.random.uniform(ks[2], (dim, dim), jnp.float32, -s, s),
        "k_b": jax.random.uniform(ks[3], (dim,), jnp.float32, -s, s),
        "v_w": jax.random.uniform(ks[4], (dim, dim), jnp.float32, -s, s),
        "v_b": jax.random.uniform(ks[5], (dim,), jnp.float32, -s, s),
        # nn.MultiheadAttention internal projections
        "in_proj_w": jax.random.uniform(ks[6], (3 * dim, dim), jnp.float32, -s, s),
        "in_proj_b": jax.random.uniform(ks[7], (3 * dim,), jnp.float32, -s, s),
        "out_proj_w": jax.random.uniform(ks[8], (dim, dim), jnp.float32, -s, s),
        "out_proj_b": jax.random.uniform(ks[9], (dim,), jnp.float32, -s, s),
    }


def prepare_fused_params(params, dim, n_heads, *, compute_dtype=jnp.bfloat16):
    """Fold outer Linear + MHA in-proj into one (E, 3E) matmul, fold the
    attention scale into Q, pre-transpose and pre-cast weights (done ONCE)."""
    E = dim
    hd = E // n_heads
    scale = 1.0 / math.sqrt(hd)
    cd = compute_dtype if compute_dtype is not None else jnp.float32

    wq_i, wk_i, wv_i = (params["in_proj_w"][:E],
                        params["in_proj_w"][E:2 * E],
                        params["in_proj_w"][2 * E:])
    bq_i, bk_i, bv_i = (params["in_proj_b"][:E],
                        params["in_proj_b"][E:2 * E],
                        params["in_proj_b"][2 * E:])

    # (x @ Wo^T + bo) @ Wi^T + bi  ==  x @ (Wi Wo)^T + (Wi bo + bi)
    wq_c = (wq_i @ params["q_w"]) * scale          # fold 1/sqrt(hd) into Q
    bq_c = (wq_i @ params["q_b"] + bq_i) * scale
    wk_c = wk_i @ params["k_w"]
    bk_c = wk_i @ params["k_b"] + bk_i
    wv_c = wv_i @ params["v_w"]
    bv_c = wv_i @ params["v_b"] + bv_i

    w_qkv_t = jnp.concatenate([wq_c, wk_c, wv_c], axis=0).T.astype(cd)   # (E, 3E)
    b_qkv = jnp.concatenate([bq_c, bk_c, bv_c]).reshape(1, 3 * E).astype(jnp.float32)
    return {
        "w_qkv_t": w_qkv_t,
        "b_qkv": b_qkv,
        "w_out_t": params["out_proj_w"].T.astype(cd),                    # (E, E)
        "b_out": params["out_proj_b"].reshape(1, E).astype(jnp.float32),
        "compute_dtype": cd,
    }


# ----------------------------------------------------------------------------
# Forward pass
# ----------------------------------------------------------------------------
def attention_forward(fused, x, n_heads):
    """x: (L, N, E) float32. Returns attn_out: (L, N, E) float32."""
    L, N, E = x.shape
    H = n_heads
    hd = E // H
    M = L * N
    cd = fused["compute_dtype"]

    xr = x.reshape(M, E).astype(cd)

    # Single fused QKV projection; output stays in compute dtype (bf16) so the
    # inter-kernel HBM traffic is halved and no extra cast pass is needed.
    qkv = pallas_matmul_bias(xr, fused["w_qkv_t"], fused["b_qkv"], out_dtype=cd)

    # Free (no-transpose) reshape into the per-head view consumed by SDPA.
    qkv5 = qkv.reshape(L, N, 3, H, hd)

    # Flash-style attention; output already in (L, N, H, hd) layout.
    o4 = pallas_sdpa(qkv5)

    # Merging heads is a free reshape (no HBM transpose); feed out_proj directly.
    o2 = o4.reshape(M, E)
    out = pallas_matmul_bias(o2, fused["w_out_t"], fused["b_out"],
                             out_dtype=jnp.float32)
    return out.reshape(L, N, E)


# ----------------------------------------------------------------------------
# Demo / smoke test
# ----------------------------------------------------------------------------
if __name__ == "__main__":
    dim = 32
    n_heads = 4
    seq = 8
    batch = 2

    key = jax.random.PRNGKey(0)
    kx, kp = jax.random.split(key)
    x = jax.random.normal(kx, (seq, batch, dim), jnp.float32)   # (L, N, E)

    params = init_attention_params(kp, dim)
    fused = prepare_fused_params(params, dim, n_heads)          # one-time fusion

    out = attention_forward(fused, x, n_heads)
    jax.block_until_ready(out)
    assert out.shape == (seq, batch, dim)
    assert out.dtype == jnp.float32
    assert bool(jnp.all(jnp.isfinite(out)))
    print("KERNEL_OK")
</pallas_src>

<mosaic_0001>
module attributes {stable_mosaic.version = 11 : i64} {
  func.func @_matmul_bias_kernel(%arg0: i32, %arg1: i32, %arg2: i32, %arg3: memref<16x32xbf16, #tpu.memory_space<vmem>>, %arg4: memref<32x96xbf16, #tpu.memory_space<vmem>>, %arg5: memref<1x96xf32, #tpu.memory_space<vmem>>, %arg6: memref<16x96xbf16, #tpu.memory_space<vmem>>, %arg7: memref<16x96xf32, #tpu.memory_space<vmem>>) attributes {dimension_semantics = [#tpu.dimension_semantics<parallel>, #tpu.dimension_semantics<parallel>, #tpu.dimension_semantics<arbitrary>], iteration_bounds = array<i64: 1, 1, 1>, scalar_prefetch = 0 : i64, scratch_operands = 1 : i64, tpu.core_type = #tpu.core_type<tc>, window_params = [{transform_indices = @transform_0, window_bounds = array<i64: 16, 32>}, {transform_indices = @transform_1, window_bounds = array<i64: 32, 96>}, {transform_indices = @transform_2, window_bounds = array<i64: 1, 96>}, {transform_indices = @transform_3, window_bounds = array<i64: 16, 96>}]} {
    %c0_i32 = arith.constant 0 : i32
    %0 = arith.cmpi eq, %arg2, %c0_i32 : i32
    %1 = arith.extui %0 : i1 to i32
    %c0_i32_0 = arith.constant 0 : i32
    %2 = arith.cmpi ne, %1, %c0_i32_0 : i32
    scf.if %2 {
      %cst_10 = arith.constant 0.000000e+00 : f32
      %12 = vector.broadcast %cst_10 : f32 to vector<16x96xf32>
      %c0_11 = arith.constant 0 : index
      %c0_12 = arith.constant 0 : index
      %13 = vector.load %arg7[%c0_11, %c0_12] : memref<16x96xf32, #tpu.memory_space<vmem>>, vector<16x96xf32>
      tpu.vector_store %arg7[%c0_11, %c0_12], %12 {strides = array<i32>} : memref<16x96xf32, #tpu.memory_space<vmem>>, vector<16x96xf32>,
    } else {
    }
    %c0 = arith.constant 0 : index
    %c0_1 = arith.constant 0 : index
    %3 = vector.load %arg7[%c0, %c0_1] : memref<16x96xf32, #tpu.memory_space<vmem>>, vector<16x96xf32>
    %c0_2 = arith.constant 0 : index
    %c0_3 = arith.constant 0 : index
    %4 = vector.load %arg3[%c0_2, %c0_3] : memref<16x32xbf16, #tpu.memory_space<vmem>>, vector<16x32xbf16>
    %c0_4 = arith.constant 0 : index
    %c0_5 = arith.constant 0 : index
    %5 = vector.load %arg4[%c0_4, %c0_5] : memref<32x96xbf16, #tpu.memory_space<vmem>>, vector<32x96xbf16>
    %cst = arith.constant dense<0.000000e+00> : vector<16x96xf32>
    %6 = tpu.matmul %4, %5, %cst {dimension_numbers = #tpu.dot_dimension_numbers<[1], [0], [0], [1], [0, 0, 1, 1], [], []>} : vector<16x32xbf16>, vector<32x96xbf16>, vector<16x96xf32> -> vector<16x96xf32>
    %7 = arith.addf %3, %6 : vector<16x96xf32>
    %c0_6 = arith.constant 0 : index
    %c0_7 = arith.constant 0 : index
    %8 = vector.load %arg7[%c0_6, %c0_7] : memref<16x96xf32, #tpu.memory_space<vmem>>, vector<16x96xf32>
    tpu.vector_store %arg7[%c0_6, %c0_7], %7 {strides = array<i32>} : memref<16x96xf32, #tpu.memory_space<vmem>>, vector<16x96xf32>,
    %c0_i32_8 = arith.constant 0 : i32
    %9 = arith.cmpi eq, %arg2, %c0_i32_8 : i32
    %10 = arith.extui %9 : i1 to i32
    %c0_i32_9 = arith.constant 0 : i32
    %11 = arith.cmpi ne, %10, %c0_i32_9 : i32
    scf.if %11 {
      %c0_10 = arith.constant 0 : index
      %c0_11 = arith.constant 0 : index
      %12 = vector.load %arg7[%c0_10, %c0_11] : memref<16x96xf32, #tpu.memory_space<vmem>>, vector<16x96xf32>
      %c0_12 = arith.constant 0 : index
      %c0_13 = arith.constant 0 : index
      %13 = vector.load %arg5[%c0_12, %c0_13] : memref<1x96xf32, #tpu.memory_space<vmem>>, vector<1x96xf32>
      %14 = vector.broadcast %13 : vector<1x96xf32> to vector<16x96xf32>
      %15 = arith.addf %12, %14 : vector<16x96xf32>
      %16 = arith.truncf %15 : vector<16x96xf32> to vector<16x96xbf16>
      %c0_14 = arith.constant 0 : index
      %c0_15 = arith.constant 0 : index
      %17 = vector.load %arg6[%c0_14, %c0_15] : memref<16x96xbf16, #tpu.memory_space<vmem>>, vector<16x96xbf16>
      tpu.vector_store %arg6[%c0_14, %c0_15], %16 {strides = array<i32>} : memref<16x96xbf16, #tpu.memory_space<vmem>>, vector<16x96xbf16>,
    } else {
    }
    return
  }
  func.func @transform_0(%arg0: i32, %arg1: i32, %arg2: i32) -> (i32, i32) {
    %c0_i32 = arith.constant 0 : i32
    return %arg0, %arg2 : i32, i32
  }
  func.func @transform_1(%arg0: i32, %arg1: i32, %arg2: i32) -> (i32, i32) {
    %c0_i32 = arith.constant 0 : i32
    return %arg2, %arg1 : i32, i32
  }
  func.func @transform_2(%arg0: i32, %arg1: i32, %arg2: i32) -> (i32, i32) {
    %c0_i32 = arith.constant 0 : i32
    %c0_i32_0 = arith.constant 0 : i32
    return %c0_i32, %arg1 : i32, i32
  }
  func.func @transform_3(%arg0: i32, %arg1: i32, %arg2: i32) -> (i32, i32) {
    %c0_i32 = arith.constant 0 : i32
    return %arg0, %arg1 : i32, i32
  }
}

</mosaic_0001>

<llo_original>
// kernel: tpu_custom_call.1
$region0: #{tpu_custom_call.1}
  #allocation0 [shape = 'u32[]', space=smem, size = 0x4, offset = 0x4, fixed_abs, tag = 'smem constant byte address 0x4 - core index']
  #allocation1 [shape = 'u32[144,128]{1,0:T(1,128)}', space=vmem, size = 0x12000, scoped, tag = 'internal scratch']
  #allocation2 [shape = 'f32[16,96]{1,0:T(8,128)}', space=vmem, size = 0x2000, scoped, tag = 'scratch operand']
  %s0 = inlined_call_operand.hbm [shape: bf16[16,32], index: 0, kind: input, shape index: {}]
  %s1 = inlined_call_operand.hbm [shape: bf16[32,96], index: 1, kind: input, shape index: {}]
  %s2 = inlined_call_operand.vmem [shape: f32[1,96], index: 2, kind: input, shape index: {}]
  %s3 = inlined_call_operand.hbm [shape: bf16[16,96], index: 3, kind: output, shape index: {}]
  %s4 = sld [smem:[#allocation0]]
  $region38: #{tpu_custom_call.1} parent=0
    _
  %s6 = ssub.s32 1, %s4
  %s7 = scalar_select 0, %s6, %s4
  $region1: #{tpu_custom_call.1} parent=0
    #allocation3 [shape = 'u8[4096]{0}', space=vmem, size = 0x1000, scoped, tag = 'input window, operand 0, single buffered']
    #allocation4 [shape = 's32[1]{0}', space=sflag, size = 0x4, scoped, tag = 'scoped memory for tpu_custom_call.1']
    #allocation5 [shape = 's32[1]{0}', space=sflag, size = 0x4, scoped, tag = 'scoped memory for tpu_custom_call.1']
    #allocation6 [shape = 'u8[8192]{0}', space=vmem, size = 0x2000, scoped, tag = 'input window, operand 1, single buffered']
    #allocation7 [shape = 's32[1]{0}', space=sflag, size = 0x4, scoped, tag = 'scoped memory for tpu_custom_call.1']
    #allocation8 [shape = 'u8[4096]{0}', space=vmem, size = 0x1000, scoped, tag = 'output window, operand 0, single buffered']
    %8 = vsyncpa [#allocation4], 0
    %9 = vsyncpa [#allocation7], 0
    %10 = vsyncpa [#allocation5], 0
    // Predicated region
    $region2: #{tpu_custom_call.1} parent=1 // pred_check
      _
    $region3: #{tpu_custom_call.1} parent=1 // pred_check_branch
      %12 = sbr.rel (0) target = $region5
    $region4: #{tpu_custom_call.1} parent=1 // pred_region
      %s14 = ssub.s32 128, 128
      %15 = vsyncadd [#allocation4], %s14
      %s16 = sshll.u32 [#allocation3], 4
      %s17 = int_to_ptr.vmem [resolvable:$true] %s16
      %22 = dma.hbm_to_vmem [thread:$0]  %s0, 128, %s17, [#allocation4], 64, 64, 4
    $region5: #{tpu_custom_call.1} parent=1 // pred_fallthru
      _
    // Predicated region
    $region6: #{tpu_custom_call.1} parent=1 // pred_check
      _
    $region7: #{tpu_custom_call.1} parent=1 // pred_check_branch
      %24 = sbr.rel (0) target = $region9
    $region8: #{tpu_custom_call.1} parent=1 // pred_region
      %s26 = ssub.s32 256, 256
      %27 = vsyncadd [#allocation7], %s26
      %s28 = sshll.u32 [#allocation6], 4
      %s29 = int_to_ptr.vmem [resolvable:$true] %s28
      %34 = dma.hbm_to_vmem [thread:$0]  %s1, 256, %s29, [#allocation7], 64, 64, 4
    $region9: #{tpu_custom_call.1} parent=1 // pred_fallthru
      _
    // Predicated region
    $region10: #{tpu_custom_call.1} parent=1 // pred_check
      _
    $region11: #{tpu_custom_call.1} parent=1 // pred_check_branch
      %36 = sbr.rel (0) target = $region13
    $region12: #{tpu_custom_call.1} parent=1 // pred_region
      _
    $region13: #{tpu_custom_call.1} parent=1 // pred_fallthru
      _
    // Predicated region
    $region14: #{tpu_custom_call.1} parent=1 // pred_check
      _
    $region15: #{tpu_custom_call.1} parent=1 // pred_check_branch
      %38 = sbr.rel (0) target = $region17
    $region16: #{tpu_custom_call.1} parent=1 // pred_region
      %39 = dma.done [#allocation4], 128
    $region17: #{tpu_custom_call.1} parent=1 // pred_fallthru
      _
    // Predicated region
    $region18: #{tpu_custom_call.1} parent=1 // pred_check
      _
    $region19: #{tpu_custom_call.1} parent=1 // pred_check_branch
      %41 = sbr.rel (0) target = $region21
    $region20: #{tpu_custom_call.1} parent=1 // pred_region
      %42 = dma.done [#allocation7], 256
    $region21: #{tpu_custom_call.1} parent=1 // pred_fallthru
      _
    %p44 = scmp.eq.s32.totalorder 0, 0
    // Predicated region
    $region22: #{tpu_custom_call.1} parent=1 // pred_check
      %p45 = pneg %p44
    $region23: #{tpu_custom_call.1} parent=1 // pred_check_branch
      %47 = sbr.rel (%p45) target = $region25
    $region24: #{tpu_custom_call.1} parent=1 // pred_region
      %vm48 = vcmask 785408
      %49 = vst.msk [vmem:[#allocation2] sm:$0xff] %vm48, 0.0
      %50 = vst.msk [vmem:[#allocation2 + $0x8] sm:$0xff] %vm48, 0.0
    $region25: #{tpu_custom_call.1} parent=1 // pred_fallthru
      _
    %v51 = vld [vmem:[#allocation2] sm:$0xff]
    %v52 = vld [vmem:[#allocation2 + $0x8] sm:$0xff]
    %v53 = vld [vmem:[#allocation3] sm:$0xf]
    %v54 = vld [vmem:[#allocation3 + $0x4] sm:$0xf]
    %v55 = vld [vmem:[#allocation6] sm:$0xf]
    %v56 = vld [vmem:[#allocation6 + $0x4] sm:$0xf]
    %v57 = vld [vmem:[#allocation6 + $0x8] sm:$0xf]
    %v58 = vld [vmem:[#allocation6 + $0xc] sm:$0xf]
    %v61 = vunpack.c.l.b16 %v53
    %v62 = vunpack.c.l.b16 %v54
    %v63 = vpack.c.b16 %v62, %v61
    %v68 = vunpack.c.l.b16 %v55
    %v69 = vunpack.c.l.b16 %v56
    %v70 = vunpack.c.l.b16 %v57
    %v71 = vunpack.c.l.b16 %v58
    %v72 = vpack.c.b16 %v69, %v68
    %v73 = vpack.c.b16 %v71, %v70
    %vm76 = vcmask 261120
    %v78 = vsel %vm76, %v63, 0
    %80 = vmatprep.subr.bf16.mxu0 0
    %81 = vmatpush1.bf16.msra.mxu0 %v72
    %82 = vmatprep.subr.bf16.mxu0 0
    %83 = vmatpush1.bf16.msra.mxu0 %v73
    %84 = vmatprep.subr.bf16.mxu0 0
    %85 = vmatpush1.bf16.msra.mxu0 0
    %86 = vmatprep.subr.bf16.mxu0 0
    %87 = vmatpush1.bf16.msra.mxu0 0
    %88 = vmatprep.subr.bf16.mxu0 0
    %89 = vmatpush1.bf16.msra.mxu0 0
    %90 = vmatprep.subr.bf16.mxu0 0
    %91 = vmatpush1.bf16.msra.mxu0 0
    %92 = vmatprep.subr.bf16.mxu0 0
    %93 = vmatpush1.bf16.msra.mxu0 0
    %94 = vmatprep.subr.bf16.mxu0 0
    %95 = vmatpush1.bf16.msra.mxu0 0
    %96 = vmatprep.subr.bf16.mxu0 0
    %97 = vmatpush1.bf16.msra.mxu0 0
    %98 = vmatprep.subr.bf16.mxu0 0
    %99 = vmatpush1.bf16.msra.mxu0 0
    %100 = vmatprep.subr.bf16.mxu0 0
    %101 = vmatpush1.bf16.msra.mxu0 0
    %102 = vmatprep.subr.bf16.mxu0 0
    %103 = vmatpush1.bf16.msra.mxu0 0
    %104 = vmatprep.subr.bf16.mxu0 0
    %105 = vmatpush1.bf16.msra.mxu0 0
    %106 = vmatprep.subr.bf16.mxu0 0
    %107 = vmatpush1.bf16.msra.mxu0 0
    %108 = vmatprep.subr.bf16.mxu0 0
    %109 = vmatpush1.bf16.msra.mxu0 0
    %110 = vmatprep.subr.bf16.mxu0 0
    %111 = vmatpush1.bf16.msra.mxu0 0
    %112 = vmatprep.mubr.bf16.mxu0 0
    %113 = vmatmul.mubr.bf16.gmra.mrb[0].mxu0 %v78
    %v114 = vpop.f32.mrb[0].mxu0
    %v115 = vadd.f32 0.0, %v114
    %v116 = vpop.f32.mrb[0].mxu0
    %v117 = vpop.f32.mrb[0].mxu0
    %v118 = vadd.f32 0.0, %v117
    %v119 = vpop.f32.mrb[0].mxu0
    %120 = vdwg.mxu0
    %v121 = vadd.f32 %v51, %v115
    %v122 = vadd.f32 %v52, %v118
    %vm123 = vcmask 785408
    %124 = vst.msk [vmem:[#allocation2] sm:$0xff] %vm123, %v121
    %125 = vst.msk [vmem:[#allocation2 + $0x8] sm:$0xff] %vm123, %v122
    // Predicated region
    $region26: #{tpu_custom_call.1} parent=1 // pred_check
      %p126 = pneg %p44
    $region27: #{tpu_custom_call.1} parent=1 // pred_check_branch
      %128 = sbr.rel (%p126) target = $region29
    $region28: #{tpu_custom_call.1} parent=1 // pred_region
      %v129 = vld [vmem:[#allocation2] sm:$0xff]
      %v130 = vld [vmem:[#allocation2 + $0x8] sm:$0xff]
      %v131 = vld [vmem:[%s2] sm:$0x1]
      %v133 = vlaneseq
      %v134 = vshrl.u32 %v133, 7
      %v135 = vsub.s32 0, %v134
      %v136 = vrot.slane %v131, %v135
      %v138 = vadd.f32 %v129, %v136
      %v139 = vadd.f32 %v130, %v136
      %v140 = vpack.c.bf16 %v139, %v138
      %v142 = vunpack.c.l.b16 %v140
      %v143 = vunpack.c.h.b16 %v140
      %v144 = vpack.c.b16 %v142, %v142
      %v145 = vpack.c.b16 %v143, %v143
      %vm148 = vcmask 781312
      %149 = vst.msk [vmem:[#allocation8] sm:$0xf] %vm148, %v144
      %150 = vst.msk [vmem:[#allocation8 + $0x4] sm:$0xf] %vm148, %v145
    $region29: #{tpu_custom_call.1} parent=1 // pred_fallthru
      _
    // Predicated region
    $region30: #{tpu_custom_call.1} parent=1 // pred_check
      _
    $region31: #{tpu_custom_call.1} parent=1 // pred_check_branch
      %152 = sbr.rel (0) target = $region33
    $region32: #{tpu_custom_call.1} parent=1 // pred_region
      %s154 = ssub.s32 128, 128
      %155 = vsyncadd [#allocation5], %s154
      %s156 = sshll.u32 [#allocation8], 4
      %s157 = int_to_ptr.vmem [resolvable:$true] %s156
      %162 = dma.vmem_to_hbm [thread:$0]  %s157, 128, %s3, [#allocation5], 64, 64, 4
    $region33: #{tpu_custom_call.1} parent=1 // pred_fallthru
      _
    // Predicated region
    $region34: #{tpu_custom_call.1} parent=1 // pred_check
      _
    $region35: #{tpu_custom_call.1} parent=1 // pred_check_branch
      %164 = sbr.rel (0) target = $region37
    $region36: #{tpu_custom_call.1} parent=1 // pred_region
      %165 = dma.done [#allocation5], 128
    $region37: #{tpu_custom_call.1} parent=1 // pred_fallthru
      _
    %166 = vsyncpa [#allocation4], 1
    %167 = vsyncpa [#allocation7], 1
    %168 = vsyncpa [#allocation5], 1

</llo_original>
